<compile_context>
chip_gen: v7x
topology: tpu7x:2x2x1
jax: 0.10.0
libtpu: 0.0.40
codegen_flags: <defaults>
</compile_context>

<pallas_src>
import jax
import jax.numpy as jnp
from jax import lax
from jax.experimental import pallas as pl
from jax.experimental.pallas import tpu as pltpu


# -----------------------------------------------------------------------------
# Kernels
# -----------------------------------------------------------------------------
def _baseline_vec_kernel(h_ref, w_ref, b_ref, o_ref):
    """output_size == 1 (the module's real config): VPU broadcast-multiply +
    lane reduce. Never touches the MXU (a (TB,K)@(K,1) matmul would be <0.1%
    MXU-utilized and only add vmatmul push / result-FIFO pop latency).

    h_ref: (TB, K) VMEM | w_ref: (1, K) VMEM | b_ref: (1,) SMEM | o_ref: (TB, 1) VMEM
    """
    # Explicit f32 accumulation so bf16 inputs still match PyTorch's f32 Linear.
    prod = h_ref[...].astype(jnp.float32) * w_ref[...].astype(jnp.float32)   # (TB, K) on the VPU
    acc = jnp.sum(prod, axis=-1, keepdims=True) + b_ref[0]                   # lane reduce + SMEM scalar bias
    o_ref[...] = jnp.maximum(acc, 0.0).astype(o_ref.dtype)


def _baseline_mxu_kernel(h_ref, wt_ref, b_ref, o_ref):
    """General output_size: weight arrives pre-transposed as (K, N) so the MXU
    consumes it natively (no per-tile in-kernel XLU transpose).

    h_ref: (TB, K) VMEM | wt_ref: (K, N) VMEM | b_ref: (1, N) VMEM | o_ref: (TB, N) VMEM
    """
    acc = jnp.dot(h_ref[...], wt_ref[...], preferred_element_type=jnp.float32)
    acc = acc + b_ref[...].astype(jnp.float32)
    o_ref[...] = jnp.maximum(acc, 0.0).astype(o_ref.dtype)


# -----------------------------------------------------------------------------
# Tiling / compiler-parameter helpers
# -----------------------------------------------------------------------------
_ROW_TILE_CAP = 1024          # 512-1024-row blocks reach ~85% of HBM roofline
_VMEM_TILE_BUDGET = 8 << 20   # per-block budget; conservative vs v5e's 16 MiB scoped default


def _pick_row_tile(rows: int, row_bytes: int) -> int:
    """Row tile that satisfies the (8,128) block rule, stays inside a
    conservative double-buffered VMEM budget, and amortizes the ~0.35us
    per-grid-step overhead."""
    if rows <= _ROW_TILE_CAP:
        return rows                                          # block == full dim: always legal
    tile = min(_ROW_TILE_CAP, max(_VMEM_TILE_BUDGET // max(row_bytes, 1), 128))
    return max(128, (tile // 128) * 128)                     # multiple of both 8 and 128


def _compiler_params() -> pltpu.CompilerParams:
    # Generation-aware VMEM limit (v7x: 64 MiB physical; v5e/v6e: 128 MiB).
    try:
        vmem_cap = pltpu.get_tpu_info().vmem_capacity_bytes or (128 << 20)
    except Exception:
        vmem_cap = 128 << 20
    return pltpu.CompilerParams(
        # Row axis is independent work: lets v7x's second TensorCore take half
        # the rows; no effect (and no cost) on single-core v5e/v6e.
        dimension_semantics=("parallel",),
        vmem_limit_bytes=min(vmem_cap // 2, 64 << 20),
    )


# -----------------------------------------------------------------------------
# Public forward
# -----------------------------------------------------------------------------
def baseline_network_forward(h_t, weight, bias):
    """relu(h_t @ weight.T + bias)  ==  baseline_network.forward.

    h_t    : (..., K) hidden state(s). Leading dims (e.g. a (T, B) rollout) are
             flattened into one row axis so the whole rollout is a single
             pallas_call (amortizes launch + DMA overhead T x).
    weight : (N, K) PyTorch nn.Linear layout.
    bias   : (N,)
    Returns: (..., N), same dtype as h_t.
    """
    h_t = lax.stop_gradient(h_t)          # `.detach()`: forward-pass no-op.
    *lead, K = h_t.shape
    N = weight.shape[0]
    h2d = h_t.reshape(-1, K)
    rows = h2d.shape[0]
    itemsize = h2d.dtype.itemsize

    if N == 1:
        # MXU-free path: weight stays (1, K) (no transpose anywhere), bias is an
        # SMEM scalar instead of a padded VMEM tile.
        tile = _pick_row_tile(rows, row_bytes=2 * (K + 1) * itemsize)
        out = pl.pallas_call(
            _baseline_vec_kernel,
            out_shape=jax.ShapeDtypeStruct((rows, 1), h2d.dtype),
            grid=(pl.cdiv(rows, tile),),
            in_specs=[
                pl.BlockSpec((tile, K), lambda i: (i, 0)),
                pl.BlockSpec((1, K), lambda i: (0, 0)),
                pl.BlockSpec(memory_space=pltpu.MemorySpace.SMEM),
            ],
            out_specs=pl.BlockSpec((tile, 1), lambda i: (i, 0)),
            compiler_params=_compiler_params(),
        )(h2d, weight, bias)
        return out.reshape(*lead, 1)

    # General-N path: one-time wrapper transpose to (K, N) feeds the MXU
    # natively (contracting the weight on its lane dim inside the kernel would
    # force an XLU transpose of the weight tile on every invocation).
    # TODO(synk): for very large K/N additionally tile K (f32 VMEM accumulator,
    # "arbitrary" reduction axis) and N; the module itself only uses N == 1.
    w_t = weight.T
    b2d = bias.reshape(1, N)
    tile = _pick_row_tile(rows, row_bytes=2 * (K + N) * itemsize)
    out = pl.pallas_call(
        _baseline_mxu_kernel,
        out_shape=jax.ShapeDtypeStruct((rows, N), h2d.dtype),
        grid=(pl.cdiv(rows, tile),),
        in_specs=[
            pl.BlockSpec((tile, K), lambda i: (i, 0)),
            pl.BlockSpec((K, N), lambda i: (0, 0)),
            pl.BlockSpec((1, N), lambda i: (0, 0)),
        ],
        out_specs=pl.BlockSpec((tile, N), lambda i: (i, 0)),
        compiler_params=_compiler_params(),
    )(h2d, w_t, b2d)
    return out.reshape(*lead, N)


def baseline_network_forward_xla(h_t, weight, bias):
    """Plain-jnp equivalent. Preferred in production at the module's real
    shapes: ~2*B*K FLOPs vs ~4*B*K bytes makes a standalone kernel launch/HBM
    bound, so letting XLA fuse relu(h @ w.T + b) into the h_t producer beats
    any standalone pallas_call."""
    h_t = lax.stop_gradient(h_t)
    return jax.nn.relu(jnp.einsum("...k,nk->...n", h_t, weight) + bias)


# -----------------------------------------------------------------------------
# Self-test
# -----------------------------------------------------------------------------
if __name__ == "__main__":
    B = 8              # batch
    input_size = 32    # core-network hidden size
    output_size = 1    # baseline head -> (B, 1)

    key = jax.random.PRNGKey(0)
    k_h, k_seq, k_w, k_b = jax.random.split(key, 4)

    # Deterministic init mimicking nn.Linear's U(-1/sqrt(fan_in), 1/sqrt(fan_in)).
    bound = float(input_size) ** -0.5
    weight = jax.random.uniform(k_w, (output_size, input_size),
                                minval=-bound, maxval=bound, dtype=jnp.float32)
    bias = jax.random.uniform(k_b, (output_size,),
                              minval=-bound, maxval=bound, dtype=jnp.float32)
    h_t = jax.random.normal(k_h, (B, input_size), dtype=jnp.float32)

    hi = jax.lax.Precision.HIGHEST   # exact-f32 references

    # --- 1) Module's real configuration: (B, K) -> (B, 1), VPU path ----------
    b_t = jax.block_until_ready(baseline_network_forward(h_t, weight, bias))
    ref = jnp.maximum(jnp.einsum("bk,nk->bn", h_t, weight, precision=hi) + bias, 0.0)
    assert b_t.shape == (B, output_size)
    assert jnp.allclose(b_t, ref, atol=1e-5, rtol=1e-5)

    # --- 2) Timestep-batched rollout: one pallas_call for (T, B, K) ----------
    T = 6
    h_seq = jax.random.normal(k_seq, (T, B, input_size), dtype=jnp.float32)
    b_seq = jax.block_until_ready(baseline_network_forward(h_seq, weight, bias))
    ref_seq = jnp.maximum(
        jnp.einsum("tbk,nk->tbn", h_seq, weight, precision=hi) + bias, 0.0)
    assert b_seq.shape == (T, B, output_size)
    assert jnp.allclose(b_seq, ref_seq, atol=1e-5, rtol=1e-5)

    # --- 3) General-N fallback (MXU path, pre-transposed (K, N) weight) ------
    N2 = 4
    k_w2, k_b2 = jax.random.split(k_w)
    weight2 = jax.random.uniform(k_w2, (N2, input_size),
                                 minval=-bound, maxval=bound, dtype=jnp.float32)
    bias2 = jax.random.uniform(k_b2, (N2,),
                               minval=-bound, maxval=bound, dtype=jnp.float32)
    b_t2 = jax.block_until_ready(baseline_network_forward(h_t, weight2, bias2))
    ref2 = jnp.maximum(
        jnp.einsum("bk,nk->bn", h_t, weight2, precision=hi) + bias2, 0.0)
    assert b_t2.shape == (B, N2)
    # MXU f32 matmuls run at the backend's default (multi-pass bf16) precision;
    # tolerance covers that while still catching layout / bias / relu mistakes.
    assert jnp.allclose(b_t2, ref2, atol=1e-2, rtol=1e-2)

    print("KERNEL_OK")
</pallas_src>

<mosaic_0001>
module attributes {stable_mosaic.version = 11 : i64} {
  func.func @_baseline_vec_kernel(%arg0: i32, %arg1: memref<8x32xf32, #tpu.memory_space<vmem>>, %arg2: memref<1x32xf32, #tpu.memory_space<vmem>>, %arg3: memref<1xf32, #tpu.memory_space<smem>>, %arg4: memref<8x1xf32, #tpu.memory_space<vmem>>) attributes {dimension_semantics = [#tpu.dimension_semantics<parallel>], iteration_bounds = array<i64: 1>, scalar_prefetch = 0 : i64, scratch_operands = 0 : i64, tpu.core_type = #tpu.core_type<tc>, window_params = [{transform_indices = @transform_0, window_bounds = array<i64: 8, 32>}, {pipeline_mode = #tpu.pipeline_mode<synchronous>, transform_indices = @transform_1, window_bounds = array<i64: 1, 32>}, {transform_indices = @transform_2, window_bounds = array<i64: 1>}, {transform_indices = @transform_3, window_bounds = array<i64: 8, 1>}]} {
    %c0 = arith.constant 0 : index
    %c0_0 = arith.constant 0 : index
    %0 = vector.load %arg1[%c0, %c0_0] : memref<8x32xf32, #tpu.memory_space<vmem>>, vector<8x32xf32>
    %c0_1 = arith.constant 0 : index
    %c0_2 = arith.constant 0 : index
    %1 = vector.load %arg2[%c0_1, %c0_2] : memref<1x32xf32, #tpu.memory_space<vmem>>, vector<1x32xf32>
    %2 = vector.broadcast %1 : vector<1x32xf32> to vector<8x32xf32>
    %3 = arith.mulf %0, %2 : vector<8x32xf32>
    %cst = arith.constant dense<0.000000e+00> : vector<8xf32>
    %4 = vector.multi_reduction <add>, %3, %cst [1] : vector<8x32xf32> to vector<8xf32>
    %5 = vector.shape_cast %4 : vector<8xf32> to vector<8x1xf32>
    %c0_3 = arith.constant 0 : index
    %6 = memref.load %arg3[%c0_3] : memref<1xf32, #tpu.memory_space<smem>>
    %7 = vector.broadcast %6 : f32 to vector<8x1xf32>
    %8 = arith.addf %5, %7 : vector<8x1xf32>
    %cst_4 = arith.constant 0.000000e+00 : f32
    %9 = vector.broadcast %cst_4 : f32 to vector<8x1xf32>
    %10 = arith.maximumf %8, %9 : vector<8x1xf32>
    %c0_5 = arith.constant 0 : index
    %c0_6 = arith.constant 0 : index
    %11 = vector.load %arg4[%c0_5, %c0_6] : memref<8x1xf32, #tpu.memory_space<vmem>>, vector<8x1xf32>
    tpu.vector_store %arg4[%c0_5, %c0_6], %10 {strides = array<i32>} : memref<8x1xf32, #tpu.memory_space<vmem>>, vector<8x1xf32>,
    return
  }
  func.func @transform_0(%arg0: i32) -> (i32, i32) {
    %c0_i32 = arith.constant 0 : i32
    %c0_i32_0 = arith.constant 0 : i32
    return %arg0, %c0_i32 : i32, i32
  }
  func.func @transform_1(%arg0: i32) -> (i32, i32) {
    %c0_i32 = arith.constant 0 : i32
    %c0_i32_0 = arith.constant 0 : i32
    %c0_i32_1 = arith.constant 0 : i32
    return %c0_i32, %c0_i32_0 : i32, i32
  }
  func.func @transform_2(%arg0: i32) -> i32 {
    %c0_i32 = arith.constant 0 : i32
    %c0_i32_0 = arith.constant 0 : i32
    return %c0_i32 : i32
  }
  func.func @transform_3(%arg0: i32) -> (i32, i32) {
    %c0_i32 = arith.constant 0 : i32
    %c0_i32_0 = arith.constant 0 : i32
    return %arg0, %c0_i32 : i32, i32
  }
}

</mosaic_0001>

<llo_original>
// kernel: tpu_custom_call.1
$region0: #{tpu_custom_call.1}
  #allocation0 [shape = 'u32[]', space=smem, size = 0x4, offset = 0x4, fixed_abs, tag = 'smem constant byte address 0x4 - core index']
  #allocation1 [shape = 'u32[144,128]{1,0:T(1,128)}', space=vmem, size = 0x12000, scoped, tag = 'internal scratch']
  #allocation2 [shape = 'f32[1]{0:T(128)S(6)}', space=smem, size = 0x200, scoped, tag = 'scoped memory for tpu_custom_call.1']
  %s0 = inlined_call_operand.hbm [shape: f32[8,32], index: 0, kind: input, shape index: {}]
  %s1 = inlined_call_operand.hbm [shape: f32[1,32], index: 1, kind: input, shape index: {}]
  %s2 = inlined_call_operand.<no memory space> [shape: f32[1], index: 2, kind: input, shape index: {}]
  %s3 = inlined_call_operand.hbm [shape: f32[8,1], index: 3, kind: output, shape index: {}]
  %s4 = sld [smem:[#allocation0]]
  $region30: #{tpu_custom_call.1} parent=0
    _
  %s6 = ssub.s32 1, %s4
  %s7 = scalar_select 0, %s6, %s4
  %8 = sst [smem:[#allocation2]] %s2
  $region1: #{tpu_custom_call.1} parent=0
    #allocation3 [shape = 'u8[4096]{0}', space=vmem, size = 0x1000, scoped, tag = 'input window, operand 0, single buffered']
    #allocation4 [shape = 's32[1]{0}', space=sflag, size = 0x4, scoped, tag = 'scoped memory for tpu_custom_call.1']
    #allocation5 [shape = 's32[1]{0}', space=sflag, size = 0x4, scoped, tag = 'scoped memory for tpu_custom_call.1']
    #allocation6 [shape = 'u8[512]{0}', space=vmem, size = 0x400, scoped, tag = 'input window, operand 1, single buffered']
    #allocation7 [shape = 's32[1]{0}', space=sflag, size = 0x4, scoped, tag = 'scoped memory for tpu_custom_call.1']
    #allocation8 [shape = 'u8[4096]{0}', space=vmem, size = 0x1000, scoped, tag = 'output window, operand 0, single buffered']
    %9 = vsyncpa [#allocation4], 0
    %10 = vsyncpa [#allocation7], 0
    %11 = vsyncpa [#allocation5], 0
    // Predicated region
    $region2: #{tpu_custom_call.1} parent=1 // pred_check
      _
    $region3: #{tpu_custom_call.1} parent=1 // pred_check_branch
      %13 = sbr.rel (0) target = $region5
    $region4: #{tpu_custom_call.1} parent=1 // pred_region
      %s15 = ssub.s32 128, 128
      %16 = vsyncadd [#allocation4], %s15
      %s18 = sshll.u32 [#allocation3], 4
      %s19 = int_to_ptr.vmem [resolvable:$true] %s18
      %21 = dma.hbm_to_vmem [thread:$0]  %s0, 128, %s19, [#allocation4]
    $region5: #{tpu_custom_call.1} parent=1 // pred_fallthru
      _
    // Predicated region
    $region6: #{tpu_custom_call.1} parent=1 // pred_check
      _
    $region7: #{tpu_custom_call.1} parent=1 // pred_check_branch
      %23 = sbr.rel (0) target = $region9
    $region8: #{tpu_custom_call.1} parent=1 // pred_region
      %s25 = ssub.s32 16, 16
      %26 = vsyncadd [#allocation7], %s25
      %s28 = sshll.u32 [#allocation6], 4
      %s29 = int_to_ptr.vmem [resolvable:$true] %s28
      %31 = dma.hbm_to_vmem [thread:$0]  %s1, 16, %s29, [#allocation7]
    $region9: #{tpu_custom_call.1} parent=1 // pred_fallthru
      _
    // Predicated region
    $region10: #{tpu_custom_call.1} parent=1 // pred_check
      _
    $region11: #{tpu_custom_call.1} parent=1 // pred_check_branch
      %33 = sbr.rel (0) target = $region13
    $region12: #{tpu_custom_call.1} parent=1 // pred_region
      _
    $region13: #{tpu_custom_call.1} parent=1 // pred_fallthru
      _
    // Predicated region
    $region14: #{tpu_custom_call.1} parent=1 // pred_check
      _
    $region15: #{tpu_custom_call.1} parent=1 // pred_check_branch
      %35 = sbr.rel (0) target = $region17
    $region16: #{tpu_custom_call.1} parent=1 // pred_region
      %36 = dma.done [#allocation4], 128
    $region17: #{tpu_custom_call.1} parent=1 // pred_fallthru
      _
    // Predicated region
    $region18: #{tpu_custom_call.1} parent=1 // pred_check
      _
    $region19: #{tpu_custom_call.1} parent=1 // pred_check_branch
      %38 = sbr.rel (0) target = $region21
    $region20: #{tpu_custom_call.1} parent=1 // pred_region
      %39 = dma.done [#allocation7], 16
    $region21: #{tpu_custom_call.1} parent=1 // pred_fallthru
      _
    %v40 = vld [vmem:[#allocation3] sm:$0xff]
    %v41 = vld [vmem:[#allocation6] sm:$0x1]
    %v43 = vlaneseq
    %v44 = vshrl.u32 %v43, 7
    %v45 = vsub.s32 0, %v44
    %v46 = vrot.slane %v41, %v45
    %v48 = vmul.f32 %v40, %v46
    %vm49 = vcmask 261120
    %v50 = vsel %vm49, %v48, 0.0
    %51 = vadd.xlane.f32.xlu0 %v50
    %v52 = vpop.xlane.xlu0 %51
    %s53 = sld [smem:[#allocation2]]
    %v54 = vstv %s53
    %v55 = vadd.f32 %v52, %v54
    %v56 = vmax.f32 %v55, 0.0
    %vm57 = vcmask 7168
    %58 = vst.msk [vmem:[#allocation8] sm:$0xff] %vm57, %v56
    // Predicated region
    $region22: #{tpu_custom_call.1} parent=1 // pred_check
      _
    $region23: #{tpu_custom_call.1} parent=1 // pred_check_branch
      %60 = sbr.rel (0) target = $region25
    $region24: #{tpu_custom_call.1} parent=1 // pred_region
      %s62 = ssub.s32 128, 128
      %63 = vsyncadd [#allocation5], %s62
      %s65 = sshll.u32 [#allocation8], 4
      %s66 = int_to_ptr.vmem [resolvable:$true] %s65
      %68 = dma.vmem_to_hbm [thread:$0]  %s66, 128, %s3, [#allocation5]
    $region25: #{tpu_custom_call.1} parent=1 // pred_fallthru
      _
    // Predicated region
    $region26: #{tpu_custom_call.1} parent=1 // pred_check
      _
    $region27: #{tpu_custom_call.1} parent=1 // pred_check_branch
      %70 = sbr.rel (0) target = $region29
    $region28: #{tpu_custom_call.1} parent=1 // pred_region
      %71 = dma.done [#allocation5], 128
    $region29: #{tpu_custom_call.1} parent=1 // pred_fallthru
      _
    %72 = vsyncpa [#allocation4], 1
    %73 = vsyncpa [#allocation7], 1
    %74 = vsyncpa [#allocation5], 1

</llo_original>
